<compile_context>
chip_gen: v6e
topology: v6e:2x2x1
jax: 0.10.0
libtpu: 0.0.40
codegen_flags: <defaults>
</compile_context>

<pallas_src>
import jax
import jax.numpy as jnp
from jax.experimental import pallas as pl
from jax.experimental.pallas import tpu as pltpu


# ---------------- Pallas kernel ----------------

def _normalize_kernel(x_ref, scale_ref, bias_ref, o_ref):
    # x: (TM, TK) tile of the flattened image; scale/bias: (TM, 1) per-row
    # (i.e. per-channel) f32 constants broadcast across the lane dimension.
    x = x_ref[...].astype(jnp.float32)
    o_ref[...] = (x * scale_ref[...] + bias_ref[...]).astype(o_ref.dtype)


# ---------------- tiling policy ----------------

def _pick_tiles(m, k, dtype):
    """Pick (tm, tk) for the (m, k) = (N*C, H*W) slab.

    * tm: full extent when small, else 256 (a multiple of every sublane pack:
      8 for f32, 16 for bf16, 32 for int8).
    * tk: grown toward ~4 MiB tiles (amortizes the ~600-cycle per-grid-step
      overhead); multiple of 128 (lane-dense, unmasked vst) unless full extent.
    * Megacore: if the grid would collapse to a single tile, split the column
      axis so a second TensorCore (v7x) has work.
    """
    dsize = jnp.dtype(dtype).itemsize
    tm = m if m <= 256 else 256

    target_bytes = 4 << 20  # ~4 MiB per input tile, constant across dtypes
    tk_cap = max(128, ((target_bytes // (tm * dsize)) // 128) * 128)
    tk = k if k <= tk_cap else tk_cap

    if pl.cdiv(m, tm) == 1 and pl.cdiv(k, tk) == 1 and k >= 256:
        # Guarantee >= 2 tiles along a "parallel" axis.
        tk = ((pl.cdiv(k, 2) + 127) // 128) * 128

    return tm, tk


# ---------------- wrapper ----------------

def _normalize_impl(img, scale_f, bias_f, *, min_pallas_bytes=1 << 20):
    """img: (N, C, H, W) or (C, H, W). scale_f/bias_f: (C,) f32 with
    scale = 1/std, bias = -mean/std, so (img - mean)/std == img*scale + bias."""
    orig_ndim = img.ndim
    if img.ndim == 3:
        img = img[None]
    n, c, h, w = img.shape
    assert scale_f.shape[0] == c and bias_f.shape[0] == c, "mean/std must have C entries"

    out_dtype = jnp.result_type(img.dtype, jnp.float32)
    m, k = n * c, h * w
    total_bytes = m * k * jnp.dtype(img.dtype).itemsize

    if total_bytes < min_pallas_bytes:
        # Small-input bypass: XLA fusion is strictly faster than the fixed
        # pallas_call / pipeline-prologue cost at this size.
        out = (img.astype(out_dtype) * scale_f.reshape(1, c, 1, 1)
               + bias_f.reshape(1, c, 1, 1)).astype(out_dtype)
        return out if orig_ndim == 4 else out[0]

    # Pure reshape (no copy, no dtype change): (N, C, H, W) -> (N*C, H*W).
    x2 = img.reshape(m, k)

    # Per-row (= per (n, c) pair) constants; tiny, DMA'd as (TM, 1) side inputs.
    scale_rows = jnp.broadcast_to(scale_f[None, :], (n, c)).reshape(m, 1)
    bias_rows = jnp.broadcast_to(bias_f[None, :], (n, c)).reshape(m, 1)

    tm, tk = _pick_tiles(m, k, img.dtype)
    grid = (pl.cdiv(m, tm), pl.cdiv(k, tk))

    out = pl.pallas_call(
        _normalize_kernel,
        out_shape=jax.ShapeDtypeStruct((m, k), out_dtype),
        grid=grid,
        in_specs=[
            pl.BlockSpec((tm, tk), lambda i, j: (i, j)),   # image tile
            pl.BlockSpec((tm, 1), lambda i, j: (i, 0)),    # per-row scale (1/std)
            pl.BlockSpec((tm, 1), lambda i, j: (i, 0)),    # per-row bias (-mean/std)
        ],
        out_specs=pl.BlockSpec((tm, tk), lambda i, j: (i, j)),
        compiler_params=pltpu.CompilerParams(
            dimension_semantics=("parallel", "parallel"),
            vmem_limit_bytes=32 * 1024 * 1024),
    )(x2, scale_rows, bias_rows)

    out = out.reshape(n, c, h, w)
    return out if orig_ndim == 4 else out[0]


def normalize(img, mean, std):
    mean_f = jnp.asarray(mean, jnp.float32).reshape(-1)
    std_f = jnp.asarray(std, jnp.float32).reshape(-1)
    return _normalize_impl(img, 1.0 / std_f, -mean_f / std_f)


class Normalization:
    """Mirror of the PyTorch Normalization module."""

    def __init__(self, mean, std):
        self.mean = jnp.asarray(mean, jnp.float32).reshape(-1, 1, 1)
        self.std = jnp.asarray(std, jnp.float32).reshape(-1, 1, 1)
        # Hoisted once: exact f32 reciprocal so the kernel is a single FMA.
        self._scale = (1.0 / self.std).reshape(-1)
        self._bias = (-self.mean / self.std).reshape(-1)

    def forward(self, img):
        return _normalize_impl(img, self._scale, self._bias)


# ---------------- main ----------------

if __name__ == "__main__":
    key = jax.random.PRNGKey(0)
    k1, k2, k3 = jax.random.split(key, 3)

    # ImageNet-style per-channel normalization constants.
    mean = [0.485, 0.456, 0.406]
    std = [0.229, 0.224, 0.225]
    module = Normalization(mean, std)

    mean_b = jnp.asarray(mean, jnp.float32).reshape(1, 3, 1, 1)
    std_b = jnp.asarray(std, jnp.float32).reshape(1, 3, 1, 1)

    # 1) Small input -> bypass path (plain XLA).
    img_small = jax.random.uniform(k1, (2, 3, 16, 16), dtype=jnp.float32)
    out_small = module.forward(img_small)
    jax.block_until_ready(out_small)
    ref_small = (img_small - mean_b) / std_b
    assert out_small.shape == img_small.shape
    assert jnp.allclose(out_small, ref_small, atol=1e-6, rtol=1e-5)

    # 2) Larger f32 input -> Pallas streaming kernel.
    img = jax.random.uniform(k2, (2, 3, 256, 256), dtype=jnp.float32)
    out = module.forward(img)
    jax.block_until_ready(out)
    ref = (img - mean_b) / std_b
    assert out.shape == img.shape and out.dtype == jnp.float32
    assert jnp.allclose(out, ref, atol=1e-6, rtol=1e-5)

    # 3) bf16 input -> Pallas kernel with f32 in-kernel math, f32 output.
    img_bf16 = jax.random.uniform(k3, (2, 3, 512, 256), dtype=jnp.float32).astype(jnp.bfloat16)
    out_bf16 = module.forward(img_bf16)
    jax.block_until_ready(out_bf16)
    ref_bf16 = (img_bf16.astype(jnp.float32) - mean_b) / std_b
    assert out_bf16.dtype == jnp.float32
    assert jnp.allclose(out_bf16, ref_bf16, atol=1e-5, rtol=1e-5)

    print("KERNEL_OK")
</pallas_src>

<mosaic_0001>
module attributes {stable_mosaic.version = 11 : i64} {
  func.func @_normalize_kernel(%arg0: i32, %arg1: i32, %arg2: memref<6x32768xf32, #tpu.memory_space<vmem>>, %arg3: memref<6x1xf32, #tpu.memory_space<vmem>>, %arg4: memref<6x1xf32, #tpu.memory_space<vmem>>, %arg5: memref<6x32768xf32, #tpu.memory_space<vmem>>) attributes {dimension_semantics = [#tpu.dimension_semantics<parallel>, #tpu.dimension_semantics<parallel>], iteration_bounds = array<i64: 1, 2>, scalar_prefetch = 0 : i64, scratch_operands = 0 : i64, tpu.core_type = #tpu.core_type<tc>, window_params = [{transform_indices = @transform_0, window_bounds = array<i64: 6, 32768>}, {transform_indices = @transform_1, window_bounds = array<i64: 6, 1>}, {transform_indices = @transform_2, window_bounds = array<i64: 6, 1>}, {transform_indices = @transform_3, window_bounds = array<i64: 6, 32768>}]} {
    %c0 = arith.constant 0 : index
    %c0_0 = arith.constant 0 : index
    %0 = vector.load %arg2[%c0, %c0_0] : memref<6x32768xf32, #tpu.memory_space<vmem>>, vector<6x32768xf32>
    %c0_1 = arith.constant 0 : index
    %c0_2 = arith.constant 0 : index
    %1 = vector.load %arg3[%c0_1, %c0_2] : memref<6x1xf32, #tpu.memory_space<vmem>>, vector<6x1xf32>
    %2 = vector.broadcast %1 : vector<6x1xf32> to vector<6x32768xf32>
    %3 = arith.mulf %0, %2 : vector<6x32768xf32>
    %c0_3 = arith.constant 0 : index
    %c0_4 = arith.constant 0 : index
    %4 = vector.load %arg4[%c0_3, %c0_4] : memref<6x1xf32, #tpu.memory_space<vmem>>, vector<6x1xf32>
    %5 = vector.broadcast %4 : vector<6x1xf32> to vector<6x32768xf32>
    %6 = arith.addf %3, %5 : vector<6x32768xf32>
    %c0_5 = arith.constant 0 : index
    %c0_6 = arith.constant 0 : index
    %7 = vector.load %arg5[%c0_5, %c0_6] : memref<6x32768xf32, #tpu.memory_space<vmem>>, vector<6x32768xf32>
    tpu.vector_store %arg5[%c0_5, %c0_6], %6 {strides = array<i32>} : memref<6x32768xf32, #tpu.memory_space<vmem>>, vector<6x32768xf32>,
    return
  }
  func.func @transform_0(%arg0: i32, %arg1: i32) -> (i32, i32) {
    %c0_i32 = arith.constant 0 : i32
    return %arg0, %arg1 : i32, i32
  }
  func.func @transform_1(%arg0: i32, %arg1: i32) -> (i32, i32) {
    %c0_i32 = arith.constant 0 : i32
    %c0_i32_0 = arith.constant 0 : i32
    return %arg0, %c0_i32 : i32, i32
  }
  func.func @transform_2(%arg0: i32, %arg1: i32) -> (i32, i32) {
    %c0_i32 = arith.constant 0 : i32
    %c0_i32_0 = arith.constant 0 : i32
    return %arg0, %c0_i32 : i32, i32
  }
  func.func @transform_3(%arg0: i32, %arg1: i32) -> (i32, i32) {
    %c0_i32 = arith.constant 0 : i32
    return %arg0, %arg1 : i32, i32
  }
}

</mosaic_0001>

<llo_original>
// kernel: tpu_custom_call.1
$region0: #{tpu_custom_call.1}
  #allocation0 [shape = 'u32[]', space=smem, size = 0x4, offset = 0x4, fixed_abs, tag = 'smem constant byte address 0x4 - core index']
  #allocation1 [shape = 'u32[144,128]{1,0:T(1,128)}', space=vmem, size = 0x12000, scoped, tag = 'internal scratch']
  %s0 = inlined_call_operand.hbm [shape: f32[6,65536], index: 0, kind: input, shape index: {}]
  %s1 = inlined_call_operand.vmem [shape: f32[6,1], index: 1, kind: input, shape index: {}]
  %s2 = inlined_call_operand.vmem [shape: f32[6,1], index: 2, kind: input, shape index: {}]
  %s3 = inlined_call_operand.hbm [shape: f32[6,65536], index: 3, kind: output, shape index: {}]
  %s4 = sld [smem:[#allocation0]]
  $region49: #{tpu_custom_call.1} parent=0
    _
  %s6 = ssub.s32 1, %s4
  %s7 = scalar_select 0, %s6, %s4
  $region1: #{tpu_custom_call.1} parent=0
    #allocation2 [shape = 'u8[2097152]{0}', space=vmem, size = 0x200000, scoped, tag = 'input window, operand 0']
    #allocation3 [shape = 's32[2]{0}', space=sflag, size = 0x8, scoped, tag = 'scoped memory for tpu_custom_call.1']
    #allocation4 [shape = 's32[2]{0}', space=sflag, size = 0x8, scoped, tag = 'scoped memory for tpu_custom_call.1']
    #allocation5 [shape = 'u8[2097152]{0}', space=vmem, size = 0x200000, scoped, tag = 'output window, operand 0']
    %8 = vsyncpa [#allocation3], 0
    %s9 = scalar_lea.sflag [#allocation3], 1
    %10 = vsyncpa %s9, 0
    %11 = vsyncpa [#allocation4], 0
    %s12 = scalar_lea.sflag [#allocation4], 1
    %13 = vsyncpa %s12, 0
    loop: start=0, step=1, limit=4
    $region2: #{tpu_custom_call.1} parent=1 // loop_pre_header
      _
    $region3: #{tpu_custom_call.1} parent=1 // loop_header
      %s15 = sphi 0, %s19
      %p16 = scmp.ge.s32.totalorder %s15, 4
      %s22 = sphi 0, %s34
      %s23 = sphi 0, %s30
      %s24 = sphi 0, %s22
      %s25 = sphi 0, %s23
      %s26 = sphi 0, %s24
      %s27 = sphi 0, %s25
      %s39 = sphi 0, %s41
      %s42 = sphi 0, %s39
      %s43 = sphi 0, %s42
      %s59 = sphi 0, %s43
      %s65 = sphi 0, %s67
      %s68 = sphi 0, %s65
      %s69 = sphi 0, %s68
      %s85 = sphi 0, %s69
      %s91 = sphi 0, %s93
      %s94 = sphi 0, %s91
      %s95 = sphi 0, %s94
      %s111 = sphi 0, %s95
      %s119 = sphi 0, %s121
      %s122 = sphi 0, %s119
      %s123 = sphi 0, %s122
      %s139 = sphi 0, %s123
    $region4: #{tpu_custom_call.1} parent=1 // loop_header_branch
      %18 = sbr.rel (%p16) target = $region8
    $region5: #{tpu_custom_call.1} parent=1 // loop_body
      %s20 = ssub.s32 %s15, 1
      %s21 = ssub.s32 %s15, 2
      %s28 = sadd.s32 1, %s23
      %p29 = scmp.ge.s32.totalorder %s28, 2
      %s30 = scalar_select %p29, 0, %s28
      %s31 = sadd.s32 1, %s22
      %s32 = scalar_select %p29, %s31, %s22
      %p33 = scmp.ge.s32.totalorder %s32, 1
      %s34 = scalar_select %p33, 0, %s32
      %s35 = ssub.s32 %s22, %s34
      %s36 = ssub.s32 %s23, %s30
      %s37 = sor.u32 %s35, %s36
      %p38 = scmp.eq.s32.totalorder %s37, 0
      %s40 = sadd.s32 %s39, 1
      %s41 = scalar_select %p38, %s39, %s40
      %p44 = pneg %p38
      %p45 = scmp.eq.s32.totalorder %s15, 1
      %p46 = por %p44, %p45
      %p47 = scmp.ne.s32.totalorder %s39, %s42
      %p48 = scmp.eq.s32.totalorder %s15, 0
      %p49 = por %p47, %p48
      %p50 = scmp.ne.s32.totalorder %s39, %s42
      %p51 = scmp.eq.s32.totalorder %s20, 1
      %p52 = por %p50, %p51
      %p53 = scmp.ne.s32.totalorder %s42, %s43
      %p54 = scmp.eq.s32.totalorder %s20, 0
      %p55 = por %p53, %p54
      %p56 = scmp.ne.s32.totalorder %s42, %s43
      %p57 = scmp.eq.s32.totalorder %s21, 1
      %p58 = por %p56, %p57
      %p60 = scmp.ne.s32.totalorder %s43, %s59
      %p61 = scmp.eq.s32.totalorder %s21, 0
      %p62 = por %p60, %p61
      %s63 = ssub.s32 %s22, %s34
      %p64 = scmp.eq.s32.totalorder %s63, 0
      %s66 = sadd.s32 %s65, 1
      %s67 = scalar_select %p64, %s65, %s66
      %p70 = pneg %p64
      %p71 = scmp.eq.s32.totalorder %s15, 1
      %p72 = por %p70, %p71
      %p73 = scmp.ne.s32.totalorder %s65, %s68
      %p74 = scmp.eq.s32.totalorder %s15, 0
      %p75 = por %p73, %p74
      %p76 = scmp.ne.s32.totalorder %s65, %s68
      %p77 = scmp.eq.s32.totalorder %s20, 1
      %p78 = por %p76, %p77
      %p79 = scmp.ne.s32.totalorder %s68, %s69
      %p80 = scmp.eq.s32.totalorder %s20, 0
      %p81 = por %p79, %p80
      %p82 = scmp.ne.s32.totalorder %s68, %s69
      %p83 = scmp.eq.s32.totalorder %s21, 1
      %p84 = por %p82, %p83
      %p86 = scmp.ne.s32.totalorder %s69, %s85
      %p87 = scmp.eq.s32.totalorder %s21, 0
      %p88 = por %p86, %p87
      %s89 = ssub.s32 %s22, %s34
      %p90 = scmp.eq.s32.totalorder %s89, 0
      %s92 = sadd.s32 %s91, 1
      %s93 = scalar_select %p90, %s91, %s92
      %p96 = pneg %p90
      %p97 = scmp.eq.s32.totalorder %s15, 1
      %p98 = por %p96, %p97
      %p99 = scmp.ne.s32.totalorder %s91, %s94
      %p100 = scmp.eq.s32.totalorder %s15, 0
      %p101 = por %p99, %p100
      %p102 = scmp.ne.s32.totalorder %s91, %s94
      %p103 = scmp.eq.s32.totalorder %s20, 1
      %p104 = por %p102, %p103
      %p105 = scmp.ne.s32.totalorder %s94, %s95
      %p106 = scmp.eq.s32.totalorder %s20, 0
      %p107 = por %p105, %p106
      %p108 = scmp.ne.s32.totalorder %s94, %s95
      %p109 = scmp.eq.s32.totalorder %s21, 1
      %p110 = por %p108, %p109
      %p112 = scmp.ne.s32.totalorder %s95, %s111
      %p113 = scmp.eq.s32.totalorder %s21, 0
      %p114 = por %p112, %p113
      %s115 = ssub.s32 %s22, %s34
      %s116 = ssub.s32 %s23, %s30
      %s117 = sor.u32 %s115, %s116
      %p118 = scmp.eq.s32.totalorder %s117, 0
      %s120 = sadd.s32 %s119, 1
      %s121 = scalar_select %p118, %s119, %s120
      %p124 = pneg %p118
      %p125 = scmp.eq.s32.totalorder %s15, 1
      %p126 = por %p124, %p125
      %p127 = scmp.ne.s32.totalorder %s119, %s122
      %p128 = scmp.eq.s32.totalorder %s15, 0
      %p129 = por %p127, %p128
      %p130 = scmp.ne.s32.totalorder %s119, %s122
      %p131 = scmp.eq.s32.totalorder %s20, 1
      %p132 = por %p130, %p131
      %p133 = scmp.ne.s32.totalorder %s122, %s123
      %p134 = scmp.eq.s32.totalorder %s20, 0
      %p135 = por %p133, %p134
      %p136 = scmp.ne.s32.totalorder %s122, %s123
      %p137 = scmp.eq.s32.totalorder %s21, 1
      %p138 = por %p136, %p137
      %p140 = scmp.ne.s32.totalorder %s123, %s139
      %p141 = scmp.eq.s32.totalorder %s21, 0
      %p142 = por %p140, %p141
      %p143 = scmp.le.s32.totalorder 1, %s15
      %p144 = scmp.lt.s32.totalorder %s15, 3
      %p145 = pnand %p143, %p144
      %p146 = pneg %p145
      // Predicated region
      $region9: #{tpu_custom_call.1} parent=5 // pred_check
        _
      $region10: #{tpu_custom_call.1} parent=5 // pred_check_branch
        %148 = sbr.rel (%p145) target = $region12
      $region11: #{tpu_custom_call.1} parent=5 // pred_region
        %s149 = ssub.s32 %s15, 1
        // Predicated region
        $region13: #{tpu_custom_call.1} parent=11 // pred_check
          %p150 = pneg %p81
        $region14: #{tpu_custom_call.1} parent=11 // pred_check_branch
          %152 = sbr.rel (%p150) target = $region16
        $region15: #{tpu_custom_call.1} parent=11 // pred_region
          %p153 = scmp.lt.s32.totalorder %s24, 0
          %s154 = scalar_select %p153, %s24, 0
          %s155 = smul.addr %s154, 8
          %s156 = scalar_lea.vmem %s1, %s155
        $region16: #{tpu_custom_call.1} parent=11 // pred_fallthru
          _
        // Predicated region
        $region17: #{tpu_custom_call.1} parent=11 // pred_check
          %p157 = pneg %p107
        $region18: #{tpu_custom_call.1} parent=11 // pred_check_branch
          %159 = sbr.rel (%p157) target = $region20
        $region19: #{tpu_custom_call.1} parent=11 // pred_region
          %p160 = scmp.lt.s32.totalorder %s24, 0
          %s161 = scalar_select %p160, %s24, 0
          %s162 = smul.addr %s161, 8
          %s163 = scalar_lea.vmem %s2, %s162
        $region20: #{tpu_custom_call.1} parent=11 // pred_fallthru
          _
      $region12: #{tpu_custom_call.1} parent=5 // pred_fallthru
        _
      %p164 = scmp.lt.s32.totalorder %s15, 2
      // Predicated region
      $region21: #{tpu_custom_call.1} parent=5 // pred_check
        %p165 = pneg %p164
      $region22: #{tpu_custom_call.1} parent=5 // pred_check_branch
        %167 = sbr.rel (%p165) target = $region24
      $region23: #{tpu_custom_call.1} parent=5 // pred_region
        // Predicated region
        $region25: #{tpu_custom_call.1} parent=23 // pred_check
          %p168 = pneg %p49
        $region26: #{tpu_custom_call.1} parent=23 // pred_check_branch
          %170 = sbr.rel (%p168) target = $region28
        $region27: #{tpu_custom_call.1} parent=23 // pred_region
          %s171 = sand.u32 %s39, 1
          %s172 = scalar_lea.sflag [#allocation3], %s171
          %s173 = sand.u32 %s39, 1
          %s174 = smul.addr %s173, 2048
          %s175 = scalar_lea.vmem [#allocation2], %s174
          %s176 = smul.u32 256, %s23
          %s178 = ssub.s32 32768, 32768
          %179 = vsyncadd %s172, %s178
          %s180 = smul.addr %s22, 512
          %s181 = sadd.s32 %s176, %s180
          %s182 = smul.addr %s181, 128
          %s183 = scalar_lea.hbm %s0, %s182
          %s185 = sshll.u32 %s175, 4
          %s186 = int_to_ptr.vmem [resolvable:$true] %s185
          %188 = dma.hbm_to_vmem [thread:$0]  %s183, 32768, %s186, %s172
        $region28: #{tpu_custom_call.1} parent=23 // pred_fallthru
          _
      $region24: #{tpu_custom_call.1} parent=5 // pred_fallthru
        _
      %p189 = scmp.le.s32.totalorder 1, %s15
      %p190 = scmp.lt.s32.totalorder %s15, 3
      %p191 = pnand %p189, %p190
      %p192 = pneg %p191
      // Predicated region
      $region29: #{tpu_custom_call.1} parent=5 // pred_check
        _
      $region30: #{tpu_custom_call.1} parent=5 // pred_check_branch
        %194 = sbr.rel (%p191) target = $region32
      $region31: #{tpu_custom_call.1} parent=5 // pred_region
        %s195 = ssub.s32 %s15, 1
        %s196 = sand.u32 %s42, 1
        %s197 = scalar_lea.sflag [#allocation3], %s196
        %s198 = sand.u32 %s42, 1
        %s199 = smul.addr %s198, 2048
        %s200 = scalar_lea.vmem [#allocation2], %s199
        // Predicated region
        $region33: #{tpu_custom_call.1} parent=31 // pred_check
          %p201 = pneg %p55
        $region34: #{tpu_custom_call.1} parent=31 // pred_check_branch
          %203 = sbr.rel (%p201) target = $region36
        $region35: #{tpu_custom_call.1} parent=31 // pred_region
          %204 = dma.done %s197, 32768
        $region36: #{tpu_custom_call.1} parent=31 // pred_fallthru
          _
        %s205 = sand.u32 %s42, 1
        %s206 = scalar_lea.sflag [#allocation3], %s205
        %s207 = sand.u32 %s42, 1
        %s208 = smul.addr %s207, 2048
        %s209 = scalar_lea.vmem [#allocation2], %s208
        %p210 = pneg %p55
        %p211 = pneg %p52
        %p212 = scmp.lt.s32.totalorder %s24, 0
        %s213 = scalar_select %p212, %s24, 0
        %s214 = smul.addr %s213, 8
        %s215 = scalar_lea.vmem %s1, %s214
        %p216 = pneg %p81
        %p217 = pneg %p78
        %p218 = scmp.lt.s32.totalorder %s24, 0
        %s219 = scalar_select %p218, %s24, 0
        %s220 = smul.addr %s219, 8
        %s221 = scalar_lea.vmem %s2, %s220
        %p222 = pneg %p107
        %p223 = pneg %p104
        %p224 = pneg %p135
        %p225 = pneg %p132
        %s226 = sand.u32 %s122, 1
        %s227 = scalar_lea.sflag [#allocation4], %s226
        %s228 = sand.u32 %s122, 1
        %s229 = smul.addr %s228, 2048
        %s230 = scalar_lea.vmem [#allocation5], %s229
        %s231 = smul.u32 256, %s25
        %p232 = scmp.lt.s32.totalorder %s24, 0
        %s233 = scalar_select %p232, %s24, 0
        %s234 = smul.addr %s233, 8
        %s235 = scalar_lea.vmem %s1, %s234
        %p236 = scmp.lt.s32.totalorder %s24, 0
        %s237 = scalar_select %p236, %s24, 0
        %s238 = smul.addr %s237, 8
        %s239 = scalar_lea.vmem %s2, %s238
        %s240 = smul.u32 256, %s25
        %v241 = vld [vmem:[%s200] sm:$0x3f]
        %v242 = vld [vmem:[%s200 + $0x8] sm:$0x3f]
        %v243 = vld [vmem:[%s200 + $0x10] sm:$0x3f]
        %v244 = vld [vmem:[%s200 + $0x18] sm:$0x3f]
        %v245 = vld [vmem:[%s200 + $0x20] sm:$0x3f]
        %v246 = vld [vmem:[%s200 + $0x28] sm:$0x3f]
        %v247 = vld [vmem:[%s200 + $0x30] sm:$0x3f]
        %v248 = vld [vmem:[%s200 + $0x38] sm:$0x3f]
        %v249 = vld [vmem:[%s200 + $0x40] sm:$0x3f]
        %v250 = vld [vmem:[%s200 + $0x48] sm:$0x3f]
        %v251 = vld [vmem:[%s200 + $0x50] sm:$0x3f]
        %v252 = vld [vmem:[%s200 + $0x58] sm:$0x3f]
        %v253 = vld [vmem:[%s200 + $0x60] sm:$0x3f]
        %v254 = vld [vmem:[%s200 + $0x68] sm:$0x3f]
        %v255 = vld [vmem:[%s200 + $0x70] sm:$0x3f]
        %v256 = vld [vmem:[%s200 + $0x78] sm:$0x3f]
        %v257 = vld [vmem:[%s200 + $0x80] sm:$0x3f]
        %v258 = vld [vmem:[%s200 + $0x88] sm:$0x3f]
        %v259 = vld [vmem:[%s200 + $0x90] sm:$0x3f]
        %v260 = vld [vmem:[%s200 + $0x98] sm:$0x3f]
        %v261 = vld [vmem:[%s200 + $0xa0] sm:$0x3f]
        %v262 = vld [vmem:[%s200 + $0xa8] sm:$0x3f]
        %v263 = vld [vmem:[%s200 + $0xb0] sm:$0x3f]
        %v264 = vld [vmem:[%s200 + $0xb8] sm:$0x3f]
        %v265 = vld [vmem:[%s200 + $0xc0] sm:$0x3f]
        %v266 = vld [vmem:[%s200 + $0xc8] sm:$0x3f]
        %v267 = vld [vmem:[%s200 + $0xd0] sm:$0x3f]
        %v268 = vld [vmem:[%s200 + $0xd8] sm:$0x3f]
        %v269 = vld [vmem:[%s200 + $0xe0] sm:$0x3f]
        %v270 = vld [vmem:[%s200 + $0xe8] sm:$0x3f]
        %v271 = vld [vmem:[%s200 + $0xf0] sm:$0x3f]
        %v272 = vld [vmem:[%s200 + $0xf8] sm:$0x3f]
        %v273 = vld [vmem:[%s200 + $0x100] sm:$0x3f]
        %v274 = vld [vmem:[%s200 + $0x108] sm:$0x3f]
        %v275 = vld [vmem:[%s200 + $0x110] sm:$0x3f]
        %v276 = vld [vmem:[%s200 + $0x118] sm:$0x3f]
        %v277 = vld [vmem:[%s200 + $0x120] sm:$0x3f]
        %v278 = vld [vmem:[%s200 + $0x128] sm:$0x3f]
        %v279 = vld [vmem:[%s200 + $0x130] sm:$0x3f]
        %v280 = vld [vmem:[%s200 + $0x138] sm:$0x3f]
        %v281 = vld [vmem:[%s200 + $0x140] sm:$0x3f]
        %v282 = vld [vmem:[%s200 + $0x148] sm:$0x3f]
        %v283 = vld [vmem:[%s200 + $0x150] sm:$0x3f]
        %v284 = vld [vmem:[%s200 + $0x158] sm:$0x3f]
        %v285 = vld [vmem:[%s200 + $0x160] sm:$0x3f]
        %v286 = vld [vmem:[%s200 + $0x168] sm:$0x3f]
        %v287 = vld [vmem:[%s200 + $0x170] sm:$0x3f]
        %v288 = vld [vmem:[%s200 + $0x178] sm:$0x3f]
        %v289 = vld [vmem:[%s200 + $0x180] sm:$0x3f]
        %v290 = vld [vmem:[%s200 + $0x188] sm:$0x3f]
        %v291 = vld [vmem:[%s200 + $0x190] sm:$0x3f]
        %v292 = vld [vmem:[%s200 + $0x198] sm:$0x3f]
        %v293 = vld [vmem:[%s200 + $0x1a0] sm:$0x3f]
        %v294 = vld [vmem:[%s200 + $0x1a8] sm:$0x3f]
        %v295 = vld [vmem:[%s200 + $0x1b0] sm:$0x3f]
        %v296 = vld [vmem:[%s200 + $0x1b8] sm:$0x3f]
        %v297 = vld [vmem:[%s200 + $0x1c0] sm:$0x3f]
        %v298 = vld [vmem:[%s200 + $0x1c8] sm:$0x3f]
        %v299 = vld [vmem:[%s200 + $0x1d0] sm:$0x3f]
        %v300 = vld [vmem:[%s200 + $0x1d8] sm:$0x3f]
        %v301 = vld [vmem:[%s200 + $0x1e0] sm:$0x3f]
        %v302 = vld [vmem:[%s200 + $0x1e8] sm:$0x3f]
        %v303 = vld [vmem:[%s200 + $0x1f0] sm:$0x3f]
        %v304 = vld [vmem:[%s200 + $0x1f8] sm:$0x3f]
        %v305 = vld [vmem:[%s200 + $0x200] sm:$0x3f]
        %v306 = vld [vmem:[%s200 + $0x208] sm:$0x3f]
        %v307 = vld [vmem:[%s200 + $0x210] sm:$0x3f]
        %v308 = vld [vmem:[%s200 + $0x218] sm:$0x3f]
        %v309 = vld [vmem:[%s200 + $0x220] sm:$0x3f]
        %v310 = vld [vmem:[%s200 + $0x228] sm:$0x3f]
        %v311 = vld [vmem:[%s200 + $0x230] sm:$0x3f]
        %v312 = vld [vmem:[%s200 + $0x238] sm:$0x3f]
        %v313 = vld [vmem:[%s200 + $0x240] sm:$0x3f]
        %v314 = vld [vmem:[%s200 + $0x248] sm:$0x3f]
        %v315 = vld [vmem:[%s200 + $0x250] sm:$0x3f]
        %v316 = vld [vmem:[%s200 + $0x258] sm:$0x3f]
        %v317 = vld [vmem:[%s200 + $0x260] sm:$0x3f]
        %v318 = vld [vmem:[%s200 + $0x268] sm:$0x3f]
        %v319 = vld [vmem:[%s200 + $0x270] sm:$0x3f]
        %v320 = vld [vmem:[%s200 + $0x278] sm:$0x3f]
        %v321 = vld [vmem:[%s200 + $0x280] sm:$0x3f]
        %v322 = vld [vmem:[%s200 + $0x288] sm:$0x3f]
        %v323 = vld [vmem:[%s200 + $0x290] sm:$0x3f]
        %v324 = vld [vmem:[%s200 + $0x298] sm:$0x3f]
        %v325 = vld [vmem:[%s200 + $0x2a0] sm:$0x3f]
        %v326 = vld [vmem:[%s200 + $0x2a8] sm:$0x3f]
        %v327 = vld [vmem:[%s200 + $0x2b0] sm:$0x3f]
        %v328 = vld [vmem:[%s200 + $0x2b8] sm:$0x3f]
        %v329 = vld [vmem:[%s200 + $0x2c0] sm:$0x3f]
        %v330 = vld [vmem:[%s200 + $0x2c8] sm:$0x3f]
        %v331 = vld [vmem:[%s200 + $0x2d0] sm:$0x3f]
        %v332 = vld [vmem:[%s200 + $0x2d8] sm:$0x3f]
        %v333 = vld [vmem:[%s200 + $0x2e0] sm:$0x3f]
        %v334 = vld [vmem:[%s200 + $0x2e8] sm:$0x3f]
        %v335 = vld [vmem:[%s200 + $0x2f0] sm:$0x3f]
        %v336 = vld [vmem:[%s200 + $0x2f8] sm:$0x3f]
        %v337 = vld [vmem:[%s200 + $0x300] sm:$0x3f]
        %v338 = vld [vmem:[%s200 + $0x308] sm:$0x3f]
        %v339 = vld [vmem:[%s200 + $0x310] sm:$0x3f]
        %v340 = vld [vmem:[%s200 + $0x318] sm:$0x3f]
        %v341 = vld [vmem:[%s200 + $0x320] sm:$0x3f]
        %v342 = vld [vmem:[%s200 + $0x328] sm:$0x3f]
        %v343 = vld [vmem:[%s200 + $0x330] sm:$0x3f]
        %v344 = vld [vmem:[%s200 + $0x338] sm:$0x3f]
        %v345 = vld [vmem:[%s200 + $0x340] sm:$0x3f]
        %v346 = vld [vmem:[%s200 + $0x348] sm:$0x3f]
        %v347 = vld [vmem:[%s200 + $0x350] sm:$0x3f]
        %v348 = vld [vmem:[%s200 + $0x358] sm:$0x3f]
        %v349 = vld [vmem:[%s200 + $0x360] sm:$0x3f]
        %v350 = vld [vmem:[%s200 + $0x368] sm:$0x3f]
        %v351 = vld [vmem:[%s200 + $0x370] sm:$0x3f]
        %v352 = vld [vmem:[%s200 + $0x378] sm:$0x3f]
        %v353 = vld [vmem:[%s200 + $0x380] sm:$0x3f]
        %v354 = vld [vmem:[%s200 + $0x388] sm:$0x3f]
        %v355 = vld [vmem:[%s200 + $0x390] sm:$0x3f]
        %v356 = vld [vmem:[%s200 + $0x398] sm:$0x3f]
        %v357 = vld [vmem:[%s200 + $0x3a0] sm:$0x3f]
        %v358 = vld [vmem:[%s200 + $0x3a8] sm:$0x3f]
        %v359 = vld [vmem:[%s200 + $0x3b0] sm:$0x3f]
        %v360 = vld [vmem:[%s200 + $0x3b8] sm:$0x3f]
        %v361 = vld [vmem:[%s200 + $0x3c0] sm:$0x3f]
        %v362 = vld [vmem:[%s200 + $0x3c8] sm:$0x3f]
        %v363 = vld [vmem:[%s200 + $0x3d0] sm:$0x3f]
        %v364 = vld [vmem:[%s200 + $0x3d8] sm:$0x3f]
        %v365 = vld [vmem:[%s200 + $0x3e0] sm:$0x3f]
        %v366 = vld [vmem:[%s200 + $0x3e8] sm:$0x3f]
        %v367 = vld [vmem:[%s200 + $0x3f0] sm:$0x3f]
        %v368 = vld [vmem:[%s200 + $0x3f8] sm:$0x3f]
        %v369 = vld [vmem:[%s200 + $0x400] sm:$0x3f]
        %v370 = vld [vmem:[%s200 + $0x408] sm:$0x3f]
        %v371 = vld [vmem:[%s200 + $0x410] sm:$0x3f]
        %v372 = vld [vmem:[%s200 + $0x418] sm:$0x3f]
        %v373 = vld [vmem:[%s200 + $0x420] sm:$0x3f]
        %v374 = vld [vmem:[%s200 + $0x428] sm:$0x3f]
        %v375 = vld [vmem:[%s200 + $0x430] sm:$0x3f]
        %v376 = vld [vmem:[%s200 + $0x438] sm:$0x3f]
        %v377 = vld [vmem:[%s200 + $0x440] sm:$0x3f]
        %v378 = vld [vmem:[%s200 + $0x448] sm:$0x3f]
        %v379 = vld [vmem:[%s200 + $0x450] sm:$0x3f]
        %v380 = vld [vmem:[%s200 + $0x458] sm:$0x3f]
        %v381 = vld [vmem:[%s200 + $0x460] sm:$0x3f]
        %v382 = vld [vmem:[%s200 + $0x468] sm:$0x3f]
        %v383 = vld [vmem:[%s200 + $0x470] sm:$0x3f]
        %v384 = vld [vmem:[%s200 + $0x478] sm:$0x3f]
        %v385 = vld [vmem:[%s200 + $0x480] sm:$0x3f]
        %v386 = vld [vmem:[%s200 + $0x488] sm:$0x3f]
        %v387 = vld [vmem:[%s200 + $0x490] sm:$0x3f]
        %v388 = vld [vmem:[%s200 + $0x498] sm:$0x3f]
        %v389 = vld [vmem:[%s200 + $0x4a0] sm:$0x3f]
        %v390 = vld [vmem:[%s200 + $0x4a8] sm:$0x3f]
        %v391 = vld [vmem:[%s200 + $0x4b0] sm:$0x3f]
        %v392 = vld [vmem:[%s200 + $0x4b8] sm:$0x3f]
        %v393 = vld [vmem:[%s200 + $0x4c0] sm:$0x3f]
        %v394 = vld [vmem:[%s200 + $0x4c8] sm:$0x3f]
        %v395 = vld [vmem:[%s200 + $0x4d0] sm:$0x3f]
        %v396 = vld [vmem:[%s200 + $0x4d8] sm:$0x3f]
        %v397 = vld [vmem:[%s200 + $0x4e0] sm:$0x3f]
        %v398 = vld [vmem:[%s200 + $0x4e8] sm:$0x3f]
        %v399 = vld [vmem:[%s200 + $0x4f0] sm:$0x3f]
        %v400 = vld [vmem:[%s200 + $0x4f8] sm:$0x3f]
        %v401 = vld [vmem:[%s200 + $0x500] sm:$0x3f]
        %v402 = vld [vmem:[%s200 + $0x508] sm:$0x3f]
        %v403 = vld [vmem:[%s200 + $0x510] sm:$0x3f]
        %v404 = vld [vmem:[%s200 + $0x518] sm:$0x3f]
        %v405 = vld [vmem:[%s200 + $0x520] sm:$0x3f]
        %v406 = vld [vmem:[%s200 + $0x528] sm:$0x3f]
        %v407 = vld [vmem:[%s200 + $0x530] sm:$0x3f]
        %v408 = vld [vmem:[%s200 + $0x538] sm:$0x3f]
        %v409 = vld [vmem:[%s200 + $0x540] sm:$0x3f]
        %v410 = vld [vmem:[%s200 + $0x548] sm:$0x3f]
        %v411 = vld [vmem:[%s200 + $0x550] sm:$0x3f]
        %v412 = vld [vmem:[%s200 + $0x558] sm:$0x3f]
        %v413 = vld [vmem:[%s200 + $0x560] sm:$0x3f]
        %v414 = vld [vmem:[%s200 + $0x568] sm:$0x3f]
        %v415 = vld [vmem:[%s200 + $0x570] sm:$0x3f]
        %v416 = vld [vmem:[%s200 + $0x578] sm:$0x3f]
        %v417 = vld [vmem:[%s200 + $0x580] sm:$0x3f]
        %v418 = vld [vmem:[%s200 + $0x588] sm:$0x3f]
        %v419 = vld [vmem:[%s200 + $0x590] sm:$0x3f]
        %v420 = vld [vmem:[%s200 + $0x598] sm:$0x3f]
        %v421 = vld [vmem:[%s200 + $0x5a0] sm:$0x3f]
        %v422 = vld [vmem:[%s200 + $0x5a8] sm:$0x3f]
        %v423 = vld [vmem:[%s200 + $0x5b0] sm:$0x3f]
        %v424 = vld [vmem:[%s200 + $0x5b8] sm:$0x3f]
        %v425 = vld [vmem:[%s200 + $0x5c0] sm:$0x3f]
        %v426 = vld [vmem:[%s200 + $0x5c8] sm:$0x3f]
        %v427 = vld [vmem:[%s200 + $0x5d0] sm:$0x3f]
        %v428 = vld [vmem:[%s200 + $0x5d8] sm:$0x3f]
        %v429 = vld [vmem:[%s200 + $0x5e0] sm:$0x3f]
        %v430 = vld [vmem:[%s200 + $0x5e8] sm:$0x3f]
        %v431 = vld [vmem:[%s200 + $0x5f0] sm:$0x3f]
        %v432 = vld [vmem:[%s200 + $0x5f8] sm:$0x3f]
        %v433 = vld [vmem:[%s200 + $0x600] sm:$0x3f]
        %v434 = vld [vmem:[%s200 + $0x608] sm:$0x3f]
        %v435 = vld [vmem:[%s200 + $0x610] sm:$0x3f]
        %v436 = vld [vmem:[%s200 + $0x618] sm:$0x3f]
        %v437 = vld [vmem:[%s200 + $0x620] sm:$0x3f]
        %v438 = vld [vmem:[%s200 + $0x628] sm:$0x3f]
        %v439 = vld [vmem:[%s200 + $0x630] sm:$0x3f]
        %v440 = vld [vmem:[%s200 + $0x638] sm:$0x3f]
        %v441 = vld [vmem:[%s200 + $0x640] sm:$0x3f]
        %v442 = vld [vmem:[%s200 + $0x648] sm:$0x3f]
        %v443 = vld [vmem:[%s200 + $0x650] sm:$0x3f]
        %v444 = vld [vmem:[%s200 + $0x658] sm:$0x3f]
        %v445 = vld [vmem:[%s200 + $0x660] sm:$0x3f]
        %v446 = vld [vmem:[%s200 + $0x668] sm:$0x3f]
        %v447 = vld [vmem:[%s200 + $0x670] sm:$0x3f]
        %v448 = vld [vmem:[%s200 + $0x678] sm:$0x3f]
        %v449 = vld [vmem:[%s200 + $0x680] sm:$0x3f]
        %v450 = vld [vmem:[%s200 + $0x688] sm:$0x3f]
        %v451 = vld [vmem:[%s200 + $0x690] sm:$0x3f]
        %v452 = vld [vmem:[%s200 + $0x698] sm:$0x3f]
        %v453 = vld [vmem:[%s200 + $0x6a0] sm:$0x3f]
        %v454 = vld [vmem:[%s200 + $0x6a8] sm:$0x3f]
        %v455 = vld [vmem:[%s200 + $0x6b0] sm:$0x3f]
        %v456 = vld [vmem:[%s200 + $0x6b8] sm:$0x3f]
        %v457 = vld [vmem:[%s200 + $0x6c0] sm:$0x3f]
        %v458 = vld [vmem:[%s200 + $0x6c8] sm:$0x3f]
        %v459 = vld [vmem:[%s200 + $0x6d0] sm:$0x3f]
        %v460 = vld [vmem:[%s200 + $0x6d8] sm:$0x3f]
        %v461 = vld [vmem:[%s200 + $0x6e0] sm:$0x3f]
        %v462 = vld [vmem:[%s200 + $0x6e8] sm:$0x3f]
        %v463 = vld [vmem:[%s200 + $0x6f0] sm:$0x3f]
        %v464 = vld [vmem:[%s200 + $0x6f8] sm:$0x3f]
        %v465 = vld [vmem:[%s200 + $0x700] sm:$0x3f]
        %v466 = vld [vmem:[%s200 + $0x708] sm:$0x3f]
        %v467 = vld [vmem:[%s200 + $0x710] sm:$0x3f]
        %v468 = vld [vmem:[%s200 + $0x718] sm:$0x3f]
        %v469 = vld [vmem:[%s200 + $0x720] sm:$0x3f]
        %v470 = vld [vmem:[%s200 + $0x728] sm:$0x3f]
        %v471 = vld [vmem:[%s200 + $0x730] sm:$0x3f]
        %v472 = vld [vmem:[%s200 + $0x738] sm:$0x3f]
        %v473 = vld [vmem:[%s200 + $0x740] sm:$0x3f]
        %v474 = vld [vmem:[%s200 + $0x748] sm:$0x3f]
        %v475 = vld [vmem:[%s200 + $0x750] sm:$0x3f]
        %v476 = vld [vmem:[%s200 + $0x758] sm:$0x3f]
        %v477 = vld [vmem:[%s200 + $0x760] sm:$0x3f]
        %v478 = vld [vmem:[%s200 + $0x768] sm:$0x3f]
        %v479 = vld [vmem:[%s200 + $0x770] sm:$0x3f]
        %v480 = vld [vmem:[%s200 + $0x778] sm:$0x3f]
        %v481 = vld [vmem:[%s200 + $0x780] sm:$0x3f]
        %v482 = vld [vmem:[%s200 + $0x788] sm:$0x3f]
        %v483 = vld [vmem:[%s200 + $0x790] sm:$0x3f]
        %v484 = vld [vmem:[%s200 + $0x798] sm:$0x3f]
        %v485 = vld [vmem:[%s200 + $0x7a0] sm:$0x3f]
        %v486 = vld [vmem:[%s200 + $0x7a8] sm:$0x3f]
        %v487 = vld [vmem:[%s200 + $0x7b0] sm:$0x3f]
        %v488 = vld [vmem:[%s200 + $0x7b8] sm:$0x3f]
        %v489 = vld [vmem:[%s200 + $0x7c0] sm:$0x3f]
        %v490 = vld [vmem:[%s200 + $0x7c8] sm:$0x3f]
        %v491 = vld [vmem:[%s200 + $0x7d0] sm:$0x3f]
        %v492 = vld [vmem:[%s200 + $0x7d8] sm:$0x3f]
        %v493 = vld [vmem:[%s200 + $0x7e0] sm:$0x3f]
        %v494 = vld [vmem:[%s200 + $0x7e8] sm:$0x3f]
        %v495 = vld [vmem:[%s200 + $0x7f0] sm:$0x3f]
        %v496 = vld [vmem:[%s200 + $0x7f8] sm:$0x3f]
        %v497 = vld [vmem:[%s235] sm:$0x3f]
        %499 = vset.pattern.permute.xlu0 0
        %500 = vperm.xlu0 %499, %v497
        %v501 = vpop.permute.xlu0 %500
        %v503 = vmul.f32 %v241, %v501
        %v504 = vmul.f32 %v242, %v501
        %v505 = vmul.f32 %v243, %v501
        %v506 = vmul.f32 %v244, %v501
        %v507 = vmul.f32 %v245, %v501
        %v508 = vmul.f32 %v246, %v501
        %v509 = vmul.f32 %v247, %v501
        %v510 = vmul.f32 %v248, %v501
        %v511 = vmul.f32 %v249, %v501
        %v512 = vmul.f32 %v250, %v501
        %v513 = vmul.f32 %v251, %v501
        %v514 = vmul.f32 %v252, %v501
        %v515 = vmul.f32 %v253, %v501
        %v516 = vmul.f32 %v254, %v501
        %v517 = vmul.f32 %v255, %v501
        %v518 = vmul.f32 %v256, %v501
        %v519 = vmul.f32 %v257, %v501
        %v520 = vmul.f32 %v258, %v501
        %v521 = vmul.f32 %v259, %v501
        %v522 = vmul.f32 %v260, %v501
        %v523 = vmul.f32 %v261, %v501
        %v524 = vmul.f32 %v262, %v501
        %v525 = vmul.f32 %v263, %v501
        %v526 = vmul.f32 %v264, %v501
        %v527 = vmul.f32 %v265, %v501
        %v528 = vmul.f32 %v266, %v501
        %v529 = vmul.f32 %v267, %v501
        %v530 = vmul.f32 %v268, %v501
        %v531 = vmul.f32 %v269, %v501
        %v532 = vmul.f32 %v270, %v501
        %v533 = vmul.f32 %v271, %v501
        %v534 = vmul.f32 %v272, %v501
        %v535 = vmul.f32 %v273, %v501
        %v536 = vmul.f32 %v274, %v501
        %v537 = vmul.f32 %v275, %v501
        %v538 = vmul.f32 %v276, %v501
        %v539 = vmul.f32 %v277, %v501
        %v540 = vmul.f32 %v278, %v501
        %v541 = vmul.f32 %v279, %v501
        %v542 = vmul.f32 %v280, %v501
        %v543 = vmul.f32 %v281, %v501
        %v544 = vmul.f32 %v282, %v501
        %v545 = vmul.f32 %v283, %v501
        %v546 = vmul.f32 %v284, %v501
        %v547 = vmul.f32 %v285, %v501
        %v548 = vmul.f32 %v286, %v501
        %v549 = vmul.f32 %v287, %v501
        %v550 = vmul.f32 %v288, %v501
        %v551 = vmul.f32 %v289, %v501
        %v552 = vmul.f32 %v290, %v501
        %v553 = vmul.f32 %v291, %v501
        %v554 = vmul.f32 %v292, %v501
        %v555 = vmul.f32 %v293, %v501
        %v556 = vmul.f32 %v294, %v501
        %v557 = vmul.f32 %v295, %v501
        %v558 = vmul.f32 %v296, %v501
        %v559 = vmul.f32 %v297, %v501
        %v560 = vmul.f32 %v298, %v501
        %v561 = vmul.f32 %v299, %v501
        %v562 = vmul.f32 %v300, %v501
        %v563 = vmul.f32 %v301, %v501
        %v564 = vmul.f32 %v302, %v501
        %v565 = vmul.f32 %v303, %v501
        %v566 = vmul.f32 %v304, %v501
        %v567 = vmul.f32 %v305, %v501
        %v568 = vmul.f32 %v306, %v501
        %v569 = vmul.f32 %v307, %v501
        %v570 = vmul.f32 %v308, %v501
        %v571 = vmul.f32 %v309, %v501
        %v572 = vmul.f32 %v310, %v501
        %v573 = vmul.f32 %v311, %v501
        %v574 = vmul.f32 %v312, %v501
        %v575 = vmul.f32 %v313, %v501
        %v576 = vmul.f32 %v314, %v501
        %v577 = vmul.f32 %v315, %v501
        %v578 = vmul.f32 %v316, %v501
        %v579 = vmul.f32 %v317, %v501
        %v580 = vmul.f32 %v318, %v501
        %v581 = vmul.f32 %v319, %v501
        %v582 = vmul.f32 %v320, %v501
        %v583 = vmul.f32 %v321, %v501
        %v584 = vmul.f32 %v322, %v501
        %v585 = vmul.f32 %v323, %v501
        %v586 = vmul.f32 %v324, %v501
        %v587 = vmul.f32 %v325, %v501
        %v588 = vmul.f32 %v326, %v501
        %v589 = vmul.f32 %v327, %v501
        %v590 = vmul.f32 %v328, %v501
        %v591 = vmul.f32 %v329, %v501
        %v592 = vmul.f32 %v330, %v501
        %v593 = vmul.f32 %v331, %v501
        %v594 = vmul.f32 %v332, %v501
        %v595 = vmul.f32 %v333, %v501
        %v596 = vmul.f32 %v334, %v501
        %v597 = vmul.f32 %v335, %v501
        %v598 = vmul.f32 %v336, %v501
        %v599 = vmul.f32 %v337, %v501
        %v600 = vmul.f32 %v338, %v501
        %v601 = vmul.f32 %v339, %v501
        %v602 = vmul.f32 %v340, %v501
        %v603 = vmul.f32 %v341, %v501
        %v604 = vmul.f32 %v342, %v501
        %v605 = vmul.f32 %v343, %v501
        %v606 = vmul.f32 %v344, %v501
        %v607 = vmul.f32 %v345, %v501
        %v608 = vmul.f32 %v346, %v501
        %v609 = vmul.f32 %v347, %v501
        %v610 = vmul.f32 %v348, %v501
        %v611 = vmul.f32 %v349, %v501
        %v612 = vmul.f32 %v350, %v501
        %v613 = vmul.f32 %v351, %v501
        %v614 = vmul.f32 %v352, %v501
        %v615 = vmul.f32 %v353, %v501
        %v616 = vmul.f32 %v354, %v501
        %v617 = vmul.f32 %v355, %v501
        %v618 = vmul.f32 %v356, %v501
        %v619 = vmul.f32 %v357, %v501
        %v620 = vmul.f32 %v358, %v501
        %v621 = vmul.f32 %v359, %v501
        %v622 = vmul.f32 %v360, %v501
        %v623 = vmul.f32 %v361, %v501
        %v624 = vmul.f32 %v362, %v501
        %v625 = vmul.f32 %v363, %v501
        %v626 = vmul.f32 %v364, %v501
        %v627 = vmul.f32 %v365, %v501
        %v628 = vmul.f32 %v366, %v501
        %v629 = vmul.f32 %v367, %v501
        %v630 = vmul.f32 %v368, %v501
        %v631 = vmul.f32 %v369, %v501
        %v632 = vmul.f32 %v370, %v501
        %v633 = vmul.f32 %v371, %v501
        %v634 = vmul.f32 %v372, %v501
        %v635 = vmul.f32 %v373, %v501
        %v636 = vmul.f32 %v374, %v501
        %v637 = vmul.f32 %v375, %v501
        %v638 = vmul.f32 %v376, %v501
        %v639 = vmul.f32 %v377, %v501
        %v640 = vmul.f32 %v378, %v501
        %v641 = vmul.f32 %v379, %v501
        %v642 = vmul.f32 %v380, %v501
        %v643 = vmul.f32 %v381, %v501
        %v644 = vmul.f32 %v382, %v501
        %v645 = vmul.f32 %v383, %v501
        %v646 = vmul.f32 %v384, %v501
        %v647 = vmul.f32 %v385, %v501
        %v648 = vmul.f32 %v386, %v501
        %v649 = vmul.f32 %v387, %v501
        %v650 = vmul.f32 %v388, %v501
        %v651 = vmul.f32 %v389, %v501
        %v652 = vmul.f32 %v390, %v501
        %v653 = vmul.f32 %v391, %v501
        %v654 = vmul.f32 %v392, %v501
        %v655 = vmul.f32 %v393, %v501
        %v656 = vmul.f32 %v394, %v501
        %v657 = vmul.f32 %v395, %v501
        %v658 = vmul.f32 %v396, %v501
        %v659 = vmul.f32 %v397, %v501
        %v660 = vmul.f32 %v398, %v501
        %v661 = vmul.f32 %v399, %v501
        %v662 = vmul.f32 %v400, %v501
        %v663 = vmul.f32 %v401, %v501
        %v664 = vmul.f32 %v402, %v501
        %v665 = vmul.f32 %v403, %v501
        %v666 = vmul.f32 %v404, %v501
        %v667 = vmul.f32 %v405, %v501
        %v668 = vmul.f32 %v406, %v501
        %v669 = vmul.f32 %v407, %v501
        %v670 = vmul.f32 %v408, %v501
        %v671 = vmul.f32 %v409, %v501
        %v672 = vmul.f32 %v410, %v501
        %v673 = vmul.f32 %v411, %v501
        %v674 = vmul.f32 %v412, %v501
        %v675 = vmul.f32 %v413, %v501
        %v676 = vmul.f32 %v414, %v501
        %v677 = vmul.f32 %v415, %v501
        %v678 = vmul.f32 %v416, %v501
        %v679 = vmul.f32 %v417, %v501
        %v680 = vmul.f32 %v418, %v501
        %v681 = vmul.f32 %v419, %v501
        %v682 = vmul.f32 %v420, %v501
        %v683 = vmul.f32 %v421, %v501
        %v684 = vmul.f32 %v422, %v501
        %v685 = vmul.f32 %v423, %v501
        %v686 = vmul.f32 %v424, %v501
        %v687 = vmul.f32 %v425, %v501
        %v688 = vmul.f32 %v426, %v501
        %v689 = vmul.f32 %v427, %v501
        %v690 = vmul.f32 %v428, %v501
        %v691 = vmul.f32 %v429, %v501
        %v692 = vmul.f32 %v430, %v501
        %v693 = vmul.f32 %v431, %v501
        %v694 = vmul.f32 %v432, %v501
        %v695 = vmul.f32 %v433, %v501
        %v696 = vmul.f32 %v434, %v501
        %v697 = vmul.f32 %v435, %v501
        %v698 = vmul.f32 %v436, %v501
        %v699 = vmul.f32 %v437, %v501
        %v700 = vmul.f32 %v438, %v501
        %v701 = vmul.f32 %v439, %v501
        %v702 = vmul.f32 %v440, %v501
        %v703 = vmul.f32 %v441, %v501
        %v704 = vmul.f32 %v442, %v501
        %v705 = vmul.f32 %v443, %v501
        %v706 = vmul.f32 %v444, %v501
        %v707 = vmul.f32 %v445, %v501
        %v708 = vmul.f32 %v446, %v501
        %v709 = vmul.f32 %v447, %v501
        %v710 = vmul.f32 %v448, %v501
        %v711 = vmul.f32 %v449, %v501
        %v712 = vmul.f32 %v450, %v501
        %v713 = vmul.f32 %v451, %v501
        %v714 = vmul.f32 %v452, %v501
        %v715 = vmul.f32 %v453, %v501
        %v716 = vmul.f32 %v454, %v501
        %v717 = vmul.f32 %v455, %v501
        %v718 = vmul.f32 %v456, %v501
        %v719 = vmul.f32 %v457, %v501
        %v720 = vmul.f32 %v458, %v501
        %v721 = vmul.f32 %v459, %v501
        %v722 = vmul.f32 %v460, %v501
        %v723 = vmul.f32 %v461, %v501
        %v724 = vmul.f32 %v462, %v501
        %v725 = vmul.f32 %v463, %v501
        %v726 = vmul.f32 %v464, %v501
        %v727 = vmul.f32 %v465, %v501
        %v728 = vmul.f32 %v466, %v501
        %v729 = vmul.f32 %v467, %v501
        %v730 = vmul.f32 %v468, %v501
        %v731 = vmul.f32 %v469, %v501
        %v732 = vmul.f32 %v470, %v501
        %v733 = vmul.f32 %v471, %v501
        %v734 = vmul.f32 %v472, %v501
        %v735 = vmul.f32 %v473, %v501
        %v736 = vmul.f32 %v474, %v501
        %v737 = vmul.f32 %v475, %v501
        %v738 = vmul.f32 %v476, %v501
        %v739 = vmul.f32 %v477, %v501
        %v740 = vmul.f32 %v478, %v501
        %v741 = vmul.f32 %v479, %v501
        %v742 = vmul.f32 %v480, %v501
        %v743 = vmul.f32 %v481, %v501
        %v744 = vmul.f32 %v482, %v501
        %v745 = vmul.f32 %v483, %v501
        %v746 = vmul.f32 %v484, %v501
        %v747 = vmul.f32 %v485, %v501
        %v748 = vmul.f32 %v486, %v501
        %v749 = vmul.f32 %v487, %v501
        %v750 = vmul.f32 %v488, %v501
        %v751 = vmul.f32 %v489, %v501
        %v752 = vmul.f32 %v490, %v501
        %v753 = vmul.f32 %v491, %v501
        %v754 = vmul.f32 %v492, %v501
        %v755 = vmul.f32 %v493, %v501
        %v756 = vmul.f32 %v494, %v501
        %v757 = vmul.f32 %v495, %v501
        %v758 = vmul.f32 %v496, %v501
        %v759 = vld [vmem:[%s239] sm:$0x3f]
        %761 = vset.pattern.permute.xlu0 0
        %762 = vperm.xlu0 %761, %v759
        %v763 = vpop.permute.xlu0 %762
        %v765 = vadd.f32 %v503, %v763
        %v766 = vadd.f32 %v504, %v763
        %v767 = vadd.f32 %v505, %v763
        %v768 = vadd.f32 %v506, %v763
        %v769 = vadd.f32 %v507, %v763
        %v770 = vadd.f32 %v508, %v763
        %v771 = vadd.f32 %v509, %v763
        %v772 = vadd.f32 %v510, %v763
        %v773 = vadd.f32 %v511, %v763
        %v774 = vadd.f32 %v512, %v763
        %v775 = vadd.f32 %v513, %v763
        %v776 = vadd.f32 %v514, %v763
        %v777 = vadd.f32 %v515, %v763
        %v778 = vadd.f32 %v516, %v763
        %v779 = vadd.f32 %v517, %v763
        %v780 = vadd.f32 %v518, %v763
        %v781 = vadd.f32 %v519, %v763
        %v782 = vadd.f32 %v520, %v763
        %v783 = vadd.f32 %v521, %v763
        %v784 = vadd.f32 %v522, %v763
        %v785 = vadd.f32 %v523, %v763
        %v786 = vadd.f32 %v524, %v763
        %v787 = vadd.f32 %v525, %v763
        %v788 = vadd.f32 %v526, %v763
        %v789 = vadd.f32 %v527, %v763
        %v790 = vadd.f32 %v528, %v763
        %v791 = vadd.f32 %v529, %v763
        %v792 = vadd.f32 %v530, %v763
        %v793 = vadd.f32 %v531, %v763
        %v794 = vadd.f32 %v532, %v763
        %v795 = vadd.f32 %v533, %v763
        %v796 = vadd.f32 %v534, %v763
        %v797 = vadd.f32 %v535, %v763
        %v798 = vadd.f32 %v536, %v763
        %v799 = vadd.f32 %v537, %v763
        %v800 = vadd.f32 %v538, %v763
        %v801 = vadd.f32 %v539, %v763
        %v802 = vadd.f32 %v540, %v763
        %v803 = vadd.f32 %v541, %v763
        %v804 = vadd.f32 %v542, %v763
        %v805 = vadd.f32 %v543, %v763
        %v806 = vadd.f32 %v544, %v763
        %v807 = vadd.f32 %v545, %v763
        %v808 = vadd.f32 %v546, %v763
        %v809 = vadd.f32 %v547, %v763
        %v810 = vadd.f32 %v548, %v763
        %v811 = vadd.f32 %v549, %v763
        %v812 = vadd.f32 %v550, %v763
        %v813 = vadd.f32 %v551, %v763
        %v814 = vadd.f32 %v552, %v763
        %v815 = vadd.f32 %v553, %v763
        %v816 = vadd.f32 %v554, %v763
        %v817 = vadd.f32 %v555, %v763
        %v818 = vadd.f32 %v556, %v763
        %v819 = vadd.f32 %v557, %v763
        %v820 = vadd.f32 %v558, %v763
        %v821 = vadd.f32 %v559, %v763
        %v822 = vadd.f32 %v560, %v763
        %v823 = vadd.f32 %v561, %v763
        %v824 = vadd.f32 %v562, %v763
        %v825 = vadd.f32 %v563, %v763
        %v826 = vadd.f32 %v564, %v763
        %v827 = vadd.f32 %v565, %v763
        %v828 = vadd.f32 %v566, %v763
        %v829 = vadd.f32 %v567, %v763
        %v830 = vadd.f32 %v568, %v763
        %v831 = vadd.f32 %v569, %v763
        %v832 = vadd.f32 %v570, %v763
        %v833 = vadd.f32 %v571, %v763
        %v834 = vadd.f32 %v572, %v763
        %v835 = vadd.f32 %v573, %v763
        %v836 = vadd.f32 %v574, %v763
        %v837 = vadd.f32 %v575, %v763
        %v838 = vadd.f32 %v576, %v763
        %v839 = vadd.f32 %v577, %v763
        %v840 = vadd.f32 %v578, %v763
        %v841 = vadd.f32 %v579, %v763
        %v842 = vadd.f32 %v580, %v763
        %v843 = vadd.f32 %v581, %v763
        %v844 = vadd.f32 %v582, %v763
        %v845 = vadd.f32 %v583, %v763
        %v846 = vadd.f32 %v584, %v763
        %v847 = vadd.f32 %v585, %v763
        %v848 = vadd.f32 %v586, %v763
        %v849 = vadd.f32 %v587, %v763
        %v850 = vadd.f32 %v588, %v763
        %v851 = vadd.f32 %v589, %v763
        %v852 = vadd.f32 %v590, %v763
        %v853 = vadd.f32 %v591, %v763
        %v854 = vadd.f32 %v592, %v763
        %v855 = vadd.f32 %v593, %v763
        %v856 = vadd.f32 %v594, %v763
        %v857 = vadd.f32 %v595, %v763
        %v858 = vadd.f32 %v596, %v763
        %v859 = vadd.f32 %v597, %v763
        %v860 = vadd.f32 %v598, %v763
        %v861 = vadd.f32 %v599, %v763
        %v862 = vadd.f32 %v600, %v763
        %v863 = vadd.f32 %v601, %v763
        %v864 = vadd.f32 %v602, %v763
        %v865 = vadd.f32 %v603, %v763
        %v866 = vadd.f32 %v604, %v763
        %v867 = vadd.f32 %v605, %v763
        %v868 = vadd.f32 %v606, %v763
        %v869 = vadd.f32 %v607, %v763
        %v870 = vadd.f32 %v608, %v763
        %v871 = vadd.f32 %v609, %v763
        %v872 = vadd.f32 %v610, %v763
        %v873 = vadd.f32 %v611, %v763
        %v874 = vadd.f32 %v612, %v763
        %v875 = vadd.f32 %v613, %v763
        %v876 = vadd.f32 %v614, %v763
        %v877 = vadd.f32 %v615, %v763
        %v878 = vadd.f32 %v616, %v763
        %v879 = vadd.f32 %v617, %v763
        %v880 = vadd.f32 %v618, %v763
        %v881 = vadd.f32 %v619, %v763
        %v882 = vadd.f32 %v620, %v763
        %v883 = vadd.f32 %v621, %v763
        %v884 = vadd.f32 %v622, %v763
        %v885 = vadd.f32 %v623, %v763
        %v886 = vadd.f32 %v624, %v763
        %v887 = vadd.f32 %v625, %v763
        %v888 = vadd.f32 %v626, %v763
        %v889 = vadd.f32 %v627, %v763
        %v890 = vadd.f32 %v628, %v763
        %v891 = vadd.f32 %v629, %v763
        %v892 = vadd.f32 %v630, %v763
        %v893 = vadd.f32 %v631, %v763
        %v894 = vadd.f32 %v632, %v763
        %v895 = vadd.f32 %v633, %v763
        %v896 = vadd.f32 %v634, %v763
        %v897 = vadd.f32 %v635, %v763
        %v898 = vadd.f32 %v636, %v763
        %v899 = vadd.f32 %v637, %v763
        %v900 = vadd.f32 %v638, %v763
        %v901 = vadd.f32 %v639, %v763
        %v902 = vadd.f32 %v640, %v763
        %v903 = vadd.f32 %v641, %v763
        %v904 = vadd.f32 %v642, %v763
        %v905 = vadd.f32 %v643, %v763
        %v906 = vadd.f32 %v644, %v763
        %v907 = vadd.f32 %v645, %v763
        %v908 = vadd.f32 %v646, %v763
        %v909 = vadd.f32 %v647, %v763
        %v910 = vadd.f32 %v648, %v763
        %v911 = vadd.f32 %v649, %v763
        %v912 = vadd.f32 %v650, %v763
        %v913 = vadd.f32 %v651, %v763
        %v914 = vadd.f32 %v652, %v763
        %v915 = vadd.f32 %v653, %v763
        %v916 = vadd.f32 %v654, %v763
        %v917 = vadd.f32 %v655, %v763
        %v918 = vadd.f32 %v656, %v763
        %v919 = vadd.f32 %v657, %v763
        %v920 = vadd.f32 %v658, %v763
        %v921 = vadd.f32 %v659, %v763
        %v922 = vadd.f32 %v660, %v763
        %v923 = vadd.f32 %v661, %v763
        %v924 = vadd.f32 %v662, %v763
        %v925 = vadd.f32 %v663, %v763
        %v926 = vadd.f32 %v664, %v763
        %v927 = vadd.f32 %v665, %v763
        %v928 = vadd.f32 %v666, %v763
        %v929 = vadd.f32 %v667, %v763
        %v930 = vadd.f32 %v668, %v763
        %v931 = vadd.f32 %v669, %v763
        %v932 = vadd.f32 %v670, %v763
        %v933 = vadd.f32 %v671, %v763
        %v934 = vadd.f32 %v672, %v763
        %v935 = vadd.f32 %v673, %v763
        %v936 = vadd.f32 %v674, %v763
        %v937 = vadd.f32 %v675, %v763
        %v938 = vadd.f32 %v676, %v763
        %v939 = vadd.f32 %v677, %v763
        %v940 = vadd.f32 %v678, %v763
        %v941 = vadd.f32 %v679, %v763
        %v942 = vadd.f32 %v680, %v763
        %v943 = vadd.f32 %v681, %v763
        %v944 = vadd.f32 %v682, %v763
        %v945 = vadd.f32 %v683, %v763
        %v946 = vadd.f32 %v684, %v763
        %v947 = vadd.f32 %v685, %v763
        %v948 = vadd.f32 %v686, %v763
        %v949 = vadd.f32 %v687, %v763
        %v950 = vadd.f32 %v688, %v763
        %v951 = vadd.f32 %v689, %v763
        %v952 = vadd.f32 %v690, %v763
        %v953 = vadd.f32 %v691, %v763
        %v954 = vadd.f32 %v692, %v763
        %v955 = vadd.f32 %v693, %v763
        %v956 = vadd.f32 %v694, %v763
        %v957 = vadd.f32 %v695, %v763
        %v958 = vadd.f32 %v696, %v763
        %v959 = vadd.f32 %v697, %v763
        %v960 = vadd.f32 %v698, %v763
        %v961 = vadd.f32 %v699, %v763
        %v962 = vadd.f32 %v700, %v763
        %v963 = vadd.f32 %v701, %v763
        %v964 = vadd.f32 %v702, %v763
        %v965 = vadd.f32 %v703, %v763
        %v966 = vadd.f32 %v704, %v763
        %v967 = vadd.f32 %v705, %v763
        %v968 = vadd.f32 %v706, %v763
        %v969 = vadd.f32 %v707, %v763
        %v970 = vadd.f32 %v708, %v763
        %v971 = vadd.f32 %v709, %v763
        %v972 = vadd.f32 %v710, %v763
        %v973 = vadd.f32 %v711, %v763
        %v974 = vadd.f32 %v712, %v763
        %v975 = vadd.f32 %v713, %v763
        %v976 = vadd.f32 %v714, %v763
        %v977 = vadd.f32 %v715, %v763
        %v978 = vadd.f32 %v716, %v763
        %v979 = vadd.f32 %v717, %v763
        %v980 = vadd.f32 %v718, %v763
        %v981 = vadd.f32 %v719, %v763
        %v982 = vadd.f32 %v720, %v763
        %v983 = vadd.f32 %v721, %v763
        %v984 = vadd.f32 %v722, %v763
        %v985 = vadd.f32 %v723, %v763
        %v986 = vadd.f32 %v724, %v763
        %v987 = vadd.f32 %v725, %v763
        %v988 = vadd.f32 %v726, %v763
        %v989 = vadd.f32 %v727, %v763
        %v990 = vadd.f32 %v728, %v763
        %v991 = vadd.f32 %v729, %v763
        %v992 = vadd.f32 %v730, %v763
        %v993 = vadd.f32 %v731, %v763
        %v994 = vadd.f32 %v732, %v763
        %v995 = vadd.f32 %v733, %v763
        %v996 = vadd.f32 %v734, %v763
        %v997 = vadd.f32 %v735, %v763
        %v998 = vadd.f32 %v736, %v763
        %v999 = vadd.f32 %v737, %v763
        %v1000 = vadd.f32 %v738, %v763
        %v1001 = vadd.f32 %v739, %v763
        %v1002 = vadd.f32 %v740, %v763
        %v1003 = vadd.f32 %v741, %v763
        %v1004 = vadd.f32 %v742, %v763
        %v1005 = vadd.f32 %v743, %v763
        %v1006 = vadd.f32 %v744, %v763
        %v1007 = vadd.f32 %v745, %v763
        %v1008 = vadd.f32 %v746, %v763
        %v1009 = vadd.f32 %v747, %v763
        %v1010 = vadd.f32 %v748, %v763
        %v1011 = vadd.f32 %v749, %v763
        %v1012 = vadd.f32 %v750, %v763
        %v1013 = vadd.f32 %v751, %v763
        %v1014 = vadd.f32 %v752, %v763
        %v1015 = vadd.f32 %v753, %v763
        %v1016 = vadd.f32 %v754, %v763
        %v1017 = vadd.f32 %v755, %v763
        %v1018 = vadd.f32 %v756, %v763
        %v1019 = vadd.f32 %v757, %v763
        %v1020 = vadd.f32 %v758, %v763
        %1021 = vst [vmem:[%s230] sm:$0x3f] %v765
        %1022 = vst [vmem:[%s230 + $0x8] sm:$0x3f] %v766
        %1023 = vst [vmem:[%s230 + $0x10] sm:$0x3f] %v767
        %1024 = vst [vmem:[%s230 + $0x18] sm:$0x3f] %v768
        %1025 = vst [vmem:[%s230 + $0x20] sm:$0x3f] %v769
        %1026 = vst [vmem:[%s230 + $0x28] sm:$0x3f] %v770
        %1027 = vst [vmem:[%s230 + $0x30] sm:$0x3f] %v771
        %1028 = vst [vmem:[%s230 + $0x38] sm:$0x3f] %v772
        %1029 = vst [vmem:[%s230 + $0x40] sm:$0x3f] %v773
        %1030 = vst [vmem:[%s230 + $0x48] sm:$0x3f] %v774
        %1031 = vst [vmem:[%s230 + $0x50] sm:$0x3f] %v775
        %1032 = vst [vmem:[%s230 + $0x58] sm:$0x3f] %v776
        %1033 = vst [vmem:[%s230 + $0x60] sm:$0x3f] %v777
        %1034 = vst [vmem:[%s230 + $0x68] sm:$0x3f] %v778
        %1035 = vst [vmem:[%s230 + $0x70] sm:$0x3f] %v779
        %1036 = vst [vmem:[%s230 + $0x78] sm:$0x3f] %v780
        %1037 = vst [vmem:[%s230 + $0x80] sm:$0x3f] %v781
        %1038 = vst [vmem:[%s230 + $0x88] sm:$0x3f] %v782
        %1039 = vst [vmem:[%s230 + $0x90] sm:$0x3f] %v783
        %1040 = vst [vmem:[%s230 + $0x98] sm:$0x3f] %v784
        %1041 = vst [vmem:[%s230 + $0xa0] sm:$0x3f] %v785
        %1042 = vst [vmem:[%s230 + $0xa8] sm:$0x3f] %v786
        %1043 = vst [vmem:[%s230 + $0xb0] sm:$0x3f] %v787
        %1044 = vst [vmem:[%s230 + $0xb8] sm:$0x3f] %v788
        %1045 = vst [vmem:[%s230 + $0xc0] sm:$0x3f] %v789
        %1046 = vst [vmem:[%s230 + $0xc8] sm:$0x3f] %v790
        %1047 = vst [vmem:[%s230 + $0xd0] sm:$0x3f] %v791
        %1048 = vst [vmem:[%s230 + $0xd8] sm:$0x3f] %v792
        %1049 = vst [vmem:[%s230 + $0xe0] sm:$0x3f] %v793
        %1050 = vst [vmem:[%s230 + $0xe8] sm:$0x3f] %v794
        %1051 = vst [vmem:[%s230 + $0xf0] sm:$0x3f] %v795
        %1052 = vst [vmem:[%s230 + $0xf8] sm:$0x3f] %v796
        %1053 = vst [vmem:[%s230 + $0x100] sm:$0x3f] %v797
        %1054 = vst [vmem:[%s230 + $0x108] sm:$0x3f] %v798
        %1055 = vst [vmem:[%s230 + $0x110] sm:$0x3f] %v799
        %1056 = vst [vmem:[%s230 + $0x118] sm:$0x3f] %v800
        %1057 = vst [vmem:[%s230 + $0x120] sm:$0x3f] %v801
        %1058 = vst [vmem:[%s230 + $0x128] sm:$0x3f] %v802
        %1059 = vst [vmem:[%s230 + $0x130] sm:$0x3f] %v803
        %1060 = vst [vmem:[%s230 + $0x138] sm:$0x3f] %v804
        %1061 = vst [vmem:[%s230 + $0x140] sm:$0x3f] %v805
        %1062 = vst [vmem:[%s230 + $0x148] sm:$0x3f] %v806
        %1063 = vst [vmem:[%s230 + $0x150] sm:$0x3f] %v807
        %1064 = vst [vmem:[%s230 + $0x158] sm:$0x3f] %v808
        %1065 = vst [vmem:[%s230 + $0x160] sm:$0x3f] %v809
        %1066 = vst [vmem:[%s230 + $0x168] sm:$0x3f] %v810
        %1067 = vst [vmem:[%s230 + $0x170] sm:$0x3f] %v811
        %1068 = vst [vmem:[%s230 + $0x178] sm:$0x3f] %v812
        %1069 = vst [vmem:[%s230 + $0x180] sm:$0x3f] %v813
        %1070 = vst [vmem:[%s230 + $0x188] sm:$0x3f] %v814
        %1071 = vst [vmem:[%s230 + $0x190] sm:$0x3f] %v815
        %1072 = vst [vmem:[%s230 + $0x198] sm:$0x3f] %v816
        %1073 = vst [vmem:[%s230 + $0x1a0] sm:$0x3f] %v817
        %1074 = vst [vmem:[%s230 + $0x1a8] sm:$0x3f] %v818
        %1075 = vst [vmem:[%s230 + $0x1b0] sm:$0x3f] %v819
        %1076 = vst [vmem:[%s230 + $0x1b8] sm:$0x3f] %v820
        %1077 = vst [vmem:[%s230 + $0x1c0] sm:$0x3f] %v821
        %1078 = vst [vmem:[%s230 + $0x1c8] sm:$0x3f] %v822
        %1079 = vst [vmem:[%s230 + $0x1d0] sm:$0x3f] %v823
        %1080 = vst [vmem:[%s230 + $0x1d8] sm:$0x3f] %v824
        %1081 = vst [vmem:[%s230 + $0x1e0] sm:$0x3f] %v825
        %1082 = vst [vmem:[%s230 + $0x1e8] sm:$0x3f] %v826
        %1083 = vst [vmem:[%s230 + $0x1f0] sm:$0x3f] %v827
        %1084 = vst [vmem:[%s230 + $0x1f8] sm:$0x3f] %v828
        %1085 = vst [vmem:[%s230 + $0x200] sm:$0x3f] %v829
        %1086 = vst [vmem:[%s230 + $0x208] sm:$0x3f] %v830
        %1087 = vst [vmem:[%s230 + $0x210] sm:$0x3f] %v831
        %1088 = vst [vmem:[%s230 + $0x218] sm:$0x3f] %v832
        %1089 = vst [vmem:[%s230 + $0x220] sm:$0x3f] %v833
        %1090 = vst [vmem:[%s230 + $0x228] sm:$0x3f] %v834
        %1091 = vst [vmem:[%s230 + $0x230] sm:$0x3f] %v835
        %1092 = vst [vmem:[%s230 + $0x238] sm:$0x3f] %v836
        %1093 = vst [vmem:[%s230 + $0x240] sm:$0x3f] %v837
        %1094 = vst [vmem:[%s230 + $0x248] sm:$0x3f] %v838
        %1095 = vst [vmem:[%s230 + $0x250] sm:$0x3f] %v839
        %1096 = vst [vmem:[%s230 + $0x258] sm:$0x3f] %v840
        %1097 = vst [vmem:[%s230 + $0x260] sm:$0x3f] %v841
        %1098 = vst [vmem:[%s230 + $0x268] sm:$0x3f] %v842
        %1099 = vst [vmem:[%s230 + $0x270] sm:$0x3f] %v843
        %1100 = vst [vmem:[%s230 + $0x278] sm:$0x3f] %v844
        %1101 = vst [vmem:[%s230 + $0x280] sm:$0x3f] %v845
        %1102 = vst [vmem:[%s230 + $0x288] sm:$0x3f] %v846
        %1103 = vst [vmem:[%s230 + $0x290] sm:$0x3f] %v847
        %1104 = vst [vmem:[%s230 + $0x298] sm:$0x3f] %v848
        %1105 = vst [vmem:[%s230 + $0x2a0] sm:$0x3f] %v849
        %1106 = vst [vmem:[%s230 + $0x2a8] sm:$0x3f] %v850
        %1107 = vst [vmem:[%s230 + $0x2b0] sm:$0x3f] %v851
        %1108 = vst [vmem:[%s230 + $0x2b8] sm:$0x3f] %v852
        %1109 = vst [vmem:[%s230 + $0x2c0] sm:$0x3f] %v853
        %1110 = vst [vmem:[%s230 + $0x2c8] sm:$0x3f] %v854
        %1111 = vst [vmem:[%s230 + $0x2d0] sm:$0x3f] %v855
        %1112 = vst [vmem:[%s230 + $0x2d8] sm:$0x3f] %v856
        %1113 = vst [vmem:[%s230 + $0x2e0] sm:$0x3f] %v857
        %1114 = vst [vmem:[%s230 + $0x2e8] sm:$0x3f] %v858
        %1115 = vst [vmem:[%s230 + $0x2f0] sm:$0x3f] %v859
        %1116 = vst [vmem:[%s230 + $0x2f8] sm:$0x3f] %v860
        %1117 = vst [vmem:[%s230 + $0x300] sm:$0x3f] %v861
        %1118 = vst [vmem:[%s230 + $0x308] sm:$0x3f] %v862
        %1119 = vst [vmem:[%s230 + $0x310] sm:$0x3f] %v863
        %1120 = vst [vmem:[%s230 + $0x318] sm:$0x3f] %v864
        %1121 = vst [vmem:[%s230 + $0x320] sm:$0x3f] %v865
        %1122 = vst [vmem:[%s230 + $0x328] sm:$0x3f] %v866
        %1123 = vst [vmem:[%s230 + $0x330] sm:$0x3f] %v867
        %1124 = vst [vmem:[%s230 + $0x338] sm:$0x3f] %v868
        %1125 = vst [vmem:[%s230 + $0x340] sm:$0x3f] %v869
        %1126 = vst [vmem:[%s230 + $0x348] sm:$0x3f] %v870
        %1127 = vst [vmem:[%s230 + $0x350] sm:$0x3f] %v871
        %1128 = vst [vmem:[%s230 + $0x358] sm:$0x3f] %v872
        %1129 = vst [vmem:[%s230 + $0x360] sm:$0x3f] %v873
        %1130 = vst [vmem:[%s230 + $0x368] sm:$0x3f] %v874
        %1131 = vst [vmem:[%s230 + $0x370] sm:$0x3f] %v875
        %1132 = vst [vmem:[%s230 + $0x378] sm:$0x3f] %v876
        %1133 = vst [vmem:[%s230 + $0x380] sm:$0x3f] %v877
        %1134 = vst [vmem:[%s230 + $0x388] sm:$0x3f] %v878
        %1135 = vst [vmem:[%s230 + $0x390] sm:$0x3f] %v879
        %1136 = vst [vmem:[%s230 + $0x398] sm:$0x3f] %v880
        %1137 = vst [vmem:[%s230 + $0x3a0] sm:$0x3f] %v881
        %1138 = vst [vmem:[%s230 + $0x3a8] sm:$0x3f] %v882
        %1139 = vst [vmem:[%s230 + $0x3b0] sm:$0x3f] %v883
        %1140 = vst [vmem:[%s230 + $0x3b8] sm:$0x3f] %v884
        %1141 = vst [vmem:[%s230 + $0x3c0] sm:$0x3f] %v885
        %1142 = vst [vmem:[%s230 + $0x3c8] sm:$0x3f] %v886
        %1143 = vst [vmem:[%s230 + $0x3d0] sm:$0x3f] %v887
        %1144 = vst [vmem:[%s230 + $0x3d8] sm:$0x3f] %v888
        %1145 = vst [vmem:[%s230 + $0x3e0] sm:$0x3f] %v889
        %1146 = vst [vmem:[%s230 + $0x3e8] sm:$0x3f] %v890
        %1147 = vst [vmem:[%s230 + $0x3f0] sm:$0x3f] %v891
        %1148 = vst [vmem:[%s230 + $0x3f8] sm:$0x3f] %v892
        %1149 = vst [vmem:[%s230 + $0x400] sm:$0x3f] %v893
        %1150 = vst [vmem:[%s230 + $0x408] sm:$0x3f] %v894
        %1151 = vst [vmem:[%s230 + $0x410] sm:$0x3f] %v895
        %1152 = vst [vmem:[%s230 + $0x418] sm:$0x3f] %v896
        %1153 = vst [vmem:[%s230 + $0x420] sm:$0x3f] %v897
        %1154 = vst [vmem:[%s230 + $0x428] sm:$0x3f] %v898
        %1155 = vst [vmem:[%s230 + $0x430] sm:$0x3f] %v899
        %1156 = vst [vmem:[%s230 + $0x438] sm:$0x3f] %v900
        %1157 = vst [vmem:[%s230 + $0x440] sm:$0x3f] %v901
        %1158 = vst [vmem:[%s230 + $0x448] sm:$0x3f] %v902
        %1159 = vst [vmem:[%s230 + $0x450] sm:$0x3f] %v903
        %1160 = vst [vmem:[%s230 + $0x458] sm:$0x3f] %v904
        %1161 = vst [vmem:[%s230 + $0x460] sm:$0x3f] %v905
        %1162 = vst [vmem:[%s230 + $0x468] sm:$0x3f] %v906
        %1163 = vst [vmem:[%s230 + $0x470] sm:$0x3f] %v907
        %1164 = vst [vmem:[%s230 + $0x478] sm:$0x3f] %v908
        %1165 = vst [vmem:[%s230 + $0x480] sm:$0x3f] %v909
        %1166 = vst [vmem:[%s230 + $0x488] sm:$0x3f] %v910
        %1167 = vst [vmem:[%s230 + $0x490] sm:$0x3f] %v911
        %1168 = vst [vmem:[%s230 + $0x498] sm:$0x3f] %v912
        %1169 = vst [vmem:[%s230 + $0x4a0] sm:$0x3f] %v913
        %1170 = vst [vmem:[%s230 + $0x4a8] sm:$0x3f] %v914
        %1171 = vst [vmem:[%s230 + $0x4b0] sm:$0x3f] %v915
        %1172 = vst [vmem:[%s230 + $0x4b8] sm:$0x3f] %v916
        %1173 = vst [vmem:[%s230 + $0x4c0] sm:$0x3f] %v917
        %1174 = vst [vmem:[%s230 + $0x4c8] sm:$0x3f] %v918
        %1175 = vst [vmem:[%s230 + $0x4d0] sm:$0x3f] %v919
        %1176 = vst [vmem:[%s230 + $0x4d8] sm:$0x3f] %v920
        %1177 = vst [vmem:[%s230 + $0x4e0] sm:$0x3f] %v921
        %1178 = vst [vmem:[%s230 + $0x4e8] sm:$0x3f] %v922
        %1179 = vst [vmem:[%s230 + $0x4f0] sm:$0x3f] %v923
        %1180 = vst [vmem:[%s230 + $0x4f8] sm:$0x3f] %v924
        %1181 = vst [vmem:[%s230 + $0x500] sm:$0x3f] %v925
        %1182 = vst [vmem:[%s230 + $0x508] sm:$0x3f] %v926
        %1183 = vst [vmem:[%s230 + $0x510] sm:$0x3f] %v927
        %1184 = vst [vmem:[%s230 + $0x518] sm:$0x3f] %v928
        %1185 = vst [vmem:[%s230 + $0x520] sm:$0x3f] %v929
        %1186 = vst [vmem:[%s230 + $0x528] sm:$0x3f] %v930
        %1187 = vst [vmem:[%s230 + $0x530] sm:$0x3f] %v931
        %1188 = vst [vmem:[%s230 + $0x538] sm:$0x3f] %v932
        %1189 = vst [vmem:[%s230 + $0x540] sm:$0x3f] %v933
        %1190 = vst [vmem:[%s230 + $0x548] sm:$0x3f] %v934
        %1191 = vst [vmem:[%s230 + $0x550] sm:$0x3f] %v935
        %1192 = vst [vmem:[%s230 + $0x558] sm:$0x3f] %v936
        %1193 = vst [vmem:[%s230 + $0x560] sm:$0x3f] %v937
        %1194 = vst [vmem:[%s230 + $0x568] sm:$0x3f] %v938
        %1195 = vst [vmem:[%s230 + $0x570] sm:$0x3f] %v939
        %1196 = vst [vmem:[%s230 + $0x578] sm:$0x3f] %v940
        %1197 = vst [vmem:[%s230 + $0x580] sm:$0x3f] %v941
        %1198 = vst [vmem:[%s230 + $0x588] sm:$0x3f] %v942
        %1199 = vst [vmem:[%s230 + $0x590] sm:$0x3f] %v943
        %1200 = vst [vmem:[%s230 + $0x598] sm:$0x3f] %v944
        %1201 = vst [vmem:[%s230 + $0x5a0] sm:$0x3f] %v945
        %1202 = vst [vmem:[%s230 + $0x5a8] sm:$0x3f] %v946
        %1203 = vst [vmem:[%s230 + $0x5b0] sm:$0x3f] %v947
        %1204 = vst [vmem:[%s230 + $0x5b8] sm:$0x3f] %v948
        %1205 = vst [vmem:[%s230 + $0x5c0] sm:$0x3f] %v949
        %1206 = vst [vmem:[%s230 + $0x5c8] sm:$0x3f] %v950
        %1207 = vst [vmem:[%s230 + $0x5d0] sm:$0x3f] %v951
        %1208 = vst [vmem:[%s230 + $0x5d8] sm:$0x3f] %v952
        %1209 = vst [vmem:[%s230 + $0x5e0] sm:$0x3f] %v953
        %1210 = vst [vmem:[%s230 + $0x5e8] sm:$0x3f] %v954
        %1211 = vst [vmem:[%s230 + $0x5f0] sm:$0x3f] %v955
        %1212 = vst [vmem:[%s230 + $0x5f8] sm:$0x3f] %v956
        %1213 = vst [vmem:[%s230 + $0x600] sm:$0x3f] %v957
        %1214 = vst [vmem:[%s230 + $0x608] sm:$0x3f] %v958
        %1215 = vst [vmem:[%s230 + $0x610] sm:$0x3f] %v959
        %1216 = vst [vmem:[%s230 + $0x618] sm:$0x3f] %v960
        %1217 = vst [vmem:[%s230 + $0x620] sm:$0x3f] %v961
        %1218 = vst [vmem:[%s230 + $0x628] sm:$0x3f] %v962
        %1219 = vst [vmem:[%s230 + $0x630] sm:$0x3f] %v963
        %1220 = vst [vmem:[%s230 + $0x638] sm:$0x3f] %v964
        %1221 = vst [vmem:[%s230 + $0x640] sm:$0x3f] %v965
        %1222 = vst [vmem:[%s230 + $0x648] sm:$0x3f] %v966
        %1223 = vst [vmem:[%s230 + $0x650] sm:$0x3f] %v967
        %1224 = vst [vmem:[%s230 + $0x658] sm:$0x3f] %v968
        %1225 = vst [vmem:[%s230 + $0x660] sm:$0x3f] %v969
        %1226 = vst [vmem:[%s230 + $0x668] sm:$0x3f] %v970
        %1227 = vst [vmem:[%s230 + $0x670] sm:$0x3f] %v971
        %1228 = vst [vmem:[%s230 + $0x678] sm:$0x3f] %v972
        %1229 = vst [vmem:[%s230 + $0x680] sm:$0x3f] %v973
        %1230 = vst [vmem:[%s230 + $0x688] sm:$0x3f] %v974
        %1231 = vst [vmem:[%s230 + $0x690] sm:$0x3f] %v975
        %1232 = vst [vmem:[%s230 + $0x698] sm:$0x3f] %v976
        %1233 = vst [vmem:[%s230 + $0x6a0] sm:$0x3f] %v977
        %1234 = vst [vmem:[%s230 + $0x6a8] sm:$0x3f] %v978
        %1235 = vst [vmem:[%s230 + $0x6b0] sm:$0x3f] %v979
        %1236 = vst [vmem:[%s230 + $0x6b8] sm:$0x3f] %v980
        %1237 = vst [vmem:[%s230 + $0x6c0] sm:$0x3f] %v981
        %1238 = vst [vmem:[%s230 + $0x6c8] sm:$0x3f] %v982
        %1239 = vst [vmem:[%s230 + $0x6d0] sm:$0x3f] %v983
        %1240 = vst [vmem:[%s230 + $0x6d8] sm:$0x3f] %v984
        %1241 = vst [vmem:[%s230 + $0x6e0] sm:$0x3f] %v985
        %1242 = vst [vmem:[%s230 + $0x6e8] sm:$0x3f] %v986
        %1243 = vst [vmem:[%s230 + $0x6f0] sm:$0x3f] %v987
        %1244 = vst [vmem:[%s230 + $0x6f8] sm:$0x3f] %v988
        %1245 = vst [vmem:[%s230 + $0x700] sm:$0x3f] %v989
        %1246 = vst [vmem:[%s230 + $0x708] sm:$0x3f] %v990
        %1247 = vst [vmem:[%s230 + $0x710] sm:$0x3f] %v991
        %1248 = vst [vmem:[%s230 + $0x718] sm:$0x3f] %v992
        %1249 = vst [vmem:[%s230 + $0x720] sm:$0x3f] %v993
        %1250 = vst [vmem:[%s230 + $0x728] sm:$0x3f] %v994
        %1251 = vst [vmem:[%s230 + $0x730] sm:$0x3f] %v995
        %1252 = vst [vmem:[%s230 + $0x738] sm:$0x3f] %v996
        %1253 = vst [vmem:[%s230 + $0x740] sm:$0x3f] %v997
        %1254 = vst [vmem:[%s230 + $0x748] sm:$0x3f] %v998
        %1255 = vst [vmem:[%s230 + $0x750] sm:$0x3f] %v999
        %1256 = vst [vmem:[%s230 + $0x758] sm:$0x3f] %v1000
        %1257 = vst [vmem:[%s230 + $0x760] sm:$0x3f] %v1001
        %1258 = vst [vmem:[%s230 + $0x768] sm:$0x3f] %v1002
        %1259 = vst [vmem:[%s230 + $0x770] sm:$0x3f] %v1003
        %1260 = vst [vmem:[%s230 + $0x778] sm:$0x3f] %v1004
        %1261 = vst [vmem:[%s230 + $0x780] sm:$0x3f] %v1005
        %1262 = vst [vmem:[%s230 + $0x788] sm:$0x3f] %v1006
        %1263 = vst [vmem:[%s230 + $0x790] sm:$0x3f] %v1007
        %1264 = vst [vmem:[%s230 + $0x798] sm:$0x3f] %v1008
        %1265 = vst [vmem:[%s230 + $0x7a0] sm:$0x3f] %v1009
        %1266 = vst [vmem:[%s230 + $0x7a8] sm:$0x3f] %v1010
        %1267 = vst [vmem:[%s230 + $0x7b0] sm:$0x3f] %v1011
        %1268 = vst [vmem:[%s230 + $0x7b8] sm:$0x3f] %v1012
        %1269 = vst [vmem:[%s230 + $0x7c0] sm:$0x3f] %v1013
        %1270 = vst [vmem:[%s230 + $0x7c8] sm:$0x3f] %v1014
        %1271 = vst [vmem:[%s230 + $0x7d0] sm:$0x3f] %v1015
        %1272 = vst [vmem:[%s230 + $0x7d8] sm:$0x3f] %v1016
        %1273 = vst [vmem:[%s230 + $0x7e0] sm:$0x3f] %v1017
        %1274 = vst [vmem:[%s230 + $0x7e8] sm:$0x3f] %v1018
        %1275 = vst [vmem:[%s230 + $0x7f0] sm:$0x3f] %v1019
        %1276 = vst [vmem:[%s230 + $0x7f8] sm:$0x3f] %v1020
        %s1277 = sand.u32 %s122, 1
        %s1278 = scalar_lea.sflag [#allocation4], %s1277
        %s1279 = sand.u32 %s122, 1
        %s1280 = smul.addr %s1279, 2048
        %s1281 = scalar_lea.vmem [#allocation5], %s1280
        // Predicated region
        $region37: #{tpu_custom_call.1} parent=31 // pred_check
          %p1282 = pneg %p132
        $region38: #{tpu_custom_call.1} parent=31 // pred_check_branch
          %1284 = sbr.rel (%p1282) target = $region40
        $region39: #{tpu_custom_call.1} parent=31 // pred_region
          %s1285 = smul.u32 256, %s25
          %s1287 = ssub.s32 32768, 32768
          %1288 = vsyncadd %s1278, %s1287
          %s1289 = smul.addr %s24, 512
          %s1290 = sadd.s32 %s1285, %s1289
          %s1291 = smul.addr %s1290, 128
          %s1292 = scalar_lea.hbm %s3, %s1291
          %s1294 = sshll.u32 %s1281, 4
          %s1295 = int_to_ptr.vmem [resolvable:$true] %s1294
          %1297 = dma.vmem_to_hbm [thread:$0]  %s1295, 32768, %s1292, %s1278
        $region40: #{tpu_custom_call.1} parent=31 // pred_fallthru
          _
      $region32: #{tpu_custom_call.1} parent=5 // pred_fallthru
        _
      %p1298 = scmp.le.s32.totalorder 2, %s15
      // Predicated region
      $region41: #{tpu_custom_call.1} parent=5 // pred_check
        %p1299 = pneg %p1298
      $region42: #{tpu_custom_call.1} parent=5 // pred_check_branch
        %1301 = sbr.rel (%p1299) target = $region44
      $region43: #{tpu_custom_call.1} parent=5 // pred_region
        %s1302 = ssub.s32 %s15, 2
        // Predicated region
        $region45: #{tpu_custom_call.1} parent=43 // pred_check
          %p1303 = pneg %p138
        $region46: #{tpu_custom_call.1} parent=43 // pred_check_branch
          %1305 = sbr.rel (%p1303) target = $region48
        $region47: #{tpu_custom_call.1} parent=43 // pred_region
          %s1306 = sand.u32 %s123, 1
          %s1307 = scalar_lea.sflag [#allocation4], %s1306
          %s1308 = sand.u32 %s123, 1
          %s1309 = smul.addr %s1308, 2048
          %s1310 = scalar_lea.vmem [#allocation5], %s1309
          %1311 = dma.done %s1307, 32768
        $region48: #{tpu_custom_call.1} parent=43 // pred_fallthru
          _
      $region44: #{tpu_custom_call.1} parent=5 // pred_fallthru
        _
    $region6: #{tpu_custom_call.1} parent=1 // loop_footer
      %s19 = sadd.s32 1, %s15
    $region7: #{tpu_custom_call.1} parent=1 // loop_footer_branch
      %14 = sbr.rel target = $region3
    $region8: #{tpu_custom_call.1} parent=1 // loop_exit
      _
    %1312 = vsyncpa [#allocation3], 1
    %s1313 = scalar_lea.sflag [#allocation3], 1
    %1314 = vsyncpa %s1313, 1
    %1315 = vsyncpa [#allocation4], 1
    %s1316 = scalar_lea.sflag [#allocation4], 1
    %1317 = vsyncpa %s1316, 1

</llo_original>
